<compile_context>
chip_gen: v6e
topology: v6e:2x2x1
jax: 0.10.0
libtpu: 0.0.40
codegen_flags: <defaults>
</compile_context>

<pallas_src>
import functools
import math

import jax
import jax.numpy as jnp
from jax.experimental import pallas as pl
from jax.experimental.pallas import tpu as pltpu


def make_positional_table(max_len: int, hidden_size: int, dtype=jnp.float32):
    """Deterministic sinusoidal table, identical to the PyTorch __init__."""
    pos = jnp.arange(max_len, dtype=jnp.float32)[:, None]                      # (L, 1)
    div = jnp.power(10000.0,
                    jnp.arange(0, hidden_size, 2, dtype=jnp.float32) / hidden_size)
    ang = pos / div                                                            # (L, H//2)
    P = jnp.zeros((max_len, hidden_size), dtype=jnp.float32)
    P = P.at[:, 0::2].set(jnp.sin(ang))
    P = P.at[:, 1::2].set(jnp.cos(ang))
    return P[None].astype(dtype)                                               # (1, L, H)


# ---------------- layout helpers ----------------

def _fold_factor(T: int, H: int) -> int:
    """Fold k seq rows into the lane axis so the last dim is a multiple of 128."""
    if H % 128 == 0:
        return 1
    k = math.lcm(H, 128) // H
    return k if (T % k == 0) else 1


def _choose_row_tile(n_rows: int, n_cols: int, itemsize: int,
                     target_bytes: int = 2 * 1024 * 1024) -> int:
    """~2 MiB row tile, multiple of 8 rows (or the full row extent if small)."""
    rows = max(8, target_bytes // max(1, n_cols * itemsize))
    rows = (int(rows) // 8) * 8
    if rows >= n_rows:
        return n_rows
    return rows


# ---------------- kernels ----------------

def _mix32(x):
    """murmur3 fmix32 finalizer on uint32 lanes (good avalanche, cheap VPU work)."""
    x = x ^ (x >> 16)
    x = x * jnp.uint32(0x85EBCA6B)
    x = x ^ (x >> 13)
    x = x * jnp.uint32(0xC2B2AE35)
    x = x ^ (x >> 16)
    return x


def _add_pe_kernel(x_ref, p_ref, o_ref):
    # eval-mode forward: X + P[:, :T, :]   (dropout is identity)
    o_ref[...] = (x_ref[...] + p_ref[...]).astype(o_ref.dtype)


def _add_pe_dropout_kernel(seed_ref, x_ref, p_ref, o_ref, *,
                           dropout_p, tile_rows, total_rows, cols):
    # training-mode forward: dropout(X + P[:, :T, :]) with 1/(1-p) scaling.
    shape = x_ref.shape                                    # (1, tile_rows, cols)

    # Unique per-element counter over (batch, row, col); uint32 wraparound is fine.
    r0 = (pl.program_id(0) * tile_rows).astype(jnp.uint32)
    b = pl.program_id(1).astype(jnp.uint32)
    row = jax.lax.broadcasted_iota(jnp.uint32, shape, 1) + r0
    col = jax.lax.broadcasted_iota(jnp.uint32, shape, 2)
    counter = (b * jnp.uint32(total_rows) + row) * jnp.uint32(cols) + col

    key = _mix32(seed_ref[0].astype(jnp.uint32) + jnp.uint32(0x9E3779B9))
    bits = _mix32(counter ^ key)                           # uniform uint32 bits

    # Integer threshold compare: keep iff bits >= p * 2^32  (prob = 1 - p).
    thr = jnp.uint32(min(int(round(dropout_p * 4294967296.0)), 4294967295))
    scale = jnp.float32(1.0 / (1.0 - dropout_p))

    y = x_ref[...].astype(jnp.float32) + p_ref[...].astype(jnp.float32)
    o_ref[...] = jnp.where(bits >= thr, y * scale, jnp.float32(0.0)).astype(o_ref.dtype)


# ---------------- wrapper ----------------

def positional_encoding_forward(x, P, *, dropout_p=0.1, training=True, seed=0):
    """x: (B, T, H); P: (1, max_len, H). Returns dropout(x + P[:, :T, :])."""
    B, T, H = x.shape
    _, max_len, H_p = P.shape
    assert H_p == H and T <= max_len

    # Fold (T, H) -> (R, C) with C a multiple of 128 when possible (lane-dense stores).
    k = _fold_factor(T, H)
    R, C = T // k, k * H
    x_f = x.reshape(B, R, C)

    tile_r = _choose_row_tile(R, C, jnp.dtype(x.dtype).itemsize)
    grid_r = pl.cdiv(R, tile_r)

    # Positional table input: prefer the free folded view of the FULL table (no copy);
    # fall back to a tiny static slice only when the BlockSpec couldn't address it.
    if (max_len % k == 0) and (tile_r % 8 == 0 or tile_r == max_len // k):
        p_f = P.reshape(1, max_len // k, C).astype(x.dtype)
    else:
        p_f = P[:, :T, :].reshape(1, R, C).astype(x.dtype)

    # Batch is the fastest grid axis -> P's block index is constant across it (stays
    # resident in VMEM; no re-DMA per batch element).
    x_spec = pl.BlockSpec((1, tile_r, C), lambda r, b, *_: (b, r, 0))
    p_spec = pl.BlockSpec((1, tile_r, C), lambda r, b, *_: (0, r, 0))
    o_spec = pl.BlockSpec((1, tile_r, C), lambda r, b, *_: (b, r, 0))
    out_shape = jax.ShapeDtypeStruct((B, R, C), x.dtype)

    cparams = pltpu.CompilerParams(dimension_semantics=("parallel", "parallel"))

    if (not training) or dropout_p == 0.0:
        out = pl.pallas_call(
            _add_pe_kernel,
            out_shape=out_shape,
            grid_spec=pltpu.PrefetchScalarGridSpec(
                num_scalar_prefetch=0,
                grid=(grid_r, B),
                in_specs=[x_spec, p_spec],
                out_specs=o_spec,
            ),
            compiler_params=cparams,
        )(x_f, p_f)
        return out.reshape(B, T, H)

    if dropout_p >= 1.0:
        return jnp.zeros_like(x)

    seed_arr = jnp.asarray([seed], dtype=jnp.int32)
    kernel = functools.partial(
        _add_pe_dropout_kernel,
        dropout_p=float(dropout_p),
        tile_rows=tile_r,
        total_rows=grid_r * tile_r,
        cols=C,
    )
    out = pl.pallas_call(
        kernel,
        out_shape=out_shape,
        grid_spec=pltpu.PrefetchScalarGridSpec(
            num_scalar_prefetch=1,          # seed lands in SMEM
            grid=(grid_r, B),
            in_specs=[x_spec, p_spec],
            out_specs=o_spec,
        ),
        compiler_params=cparams,
    )(seed_arr, x_f, p_f)
    return out.reshape(B, T, H)


if __name__ == "__main__":
    batch, seq, hidden = 2, 8, 32
    max_len = 1000
    dropout_p = 0.1

    key = jax.random.PRNGKey(0)
    x = jax.random.normal(key, (batch, seq, hidden), dtype=jnp.float32)
    P = make_positional_table(max_len, hidden)
    y_ref = x + P[:, :seq, :]

    # training-mode forward (dropout active, deterministic seed)
    y_train = positional_encoding_forward(x, P, dropout_p=dropout_p,
                                          training=True, seed=0)
    jax.block_until_ready(y_train)
    # every element must be either dropped (0) or kept & scaled by 1/(1-p)
    scale = 1.0 / (1.0 - dropout_p)
    is_zero = jnp.abs(y_train) < 1e-7
    matches = jnp.abs(y_train - y_ref * scale) < 1e-5
    assert bool(jnp.all(is_zero | matches)), "dropout-path mismatch"

    # eval-mode forward (dropout is identity) + correctness check vs. pure JAX
    y_eval = positional_encoding_forward(x, P, dropout_p=dropout_p, training=False)
    jax.block_until_ready(y_eval)
    assert jnp.allclose(y_eval, y_ref, atol=1e-6), "eval-path mismatch"

    print("KERNEL_OK")
</pallas_src>

<mosaic_0001>
module attributes {stable_mosaic.version = 11 : i64} {
  func.func @_add_pe_dropout_kernel(%arg0: i32, %arg1: i32, %arg2: memref<1xi32, #tpu.memory_space<smem>>, %arg3: memref<1x2x128xf32, #tpu.memory_space<vmem>>, %arg4: memref<1x2x128xf32, #tpu.memory_space<vmem>>, %arg5: memref<1x2x128xf32, #tpu.memory_space<vmem>>) attributes {dimension_semantics = [#tpu.dimension_semantics<parallel>, #tpu.dimension_semantics<parallel>], iteration_bounds = array<i64: 1, 2>, scalar_prefetch = 1 : i64, scratch_operands = 0 : i64, tpu.core_type = #tpu.core_type<tc>, window_params = [{transform_indices = @transform_0, window_bounds = array<i64: 1, 2, 128>}, {transform_indices = @transform_1, window_bounds = array<i64: 1, 2, 128>}, {transform_indices = @transform_2, window_bounds = array<i64: 1, 2, 128>}]} {
    %c2_i32 = arith.constant 2 : i32
    %0 = arith.muli %arg0, %c2_i32 : i32
    %1 = tpu.iota {dimensions = array<i32: 1>} : vector<1x2x128xi32>
    %2 = vector.broadcast %0 : i32 to vector<1x2x128xi32>
    %3 = arith.addi %1, %2 : vector<1x2x128xi32>
    %4 = tpu.iota {dimensions = array<i32: 2>} : vector<1x2x128xi32>
    %c2_i32_0 = arith.constant 2 : i32
    %5 = arith.muli %arg1, %c2_i32_0 : i32
    %6 = vector.broadcast %5 : i32 to vector<1x2x128xi32>
    %7 = arith.addi %6, %3 : vector<1x2x128xi32>
    %c128_i32 = arith.constant 128 : i32
    %8 = vector.broadcast %c128_i32 : i32 to vector<1x2x128xi32>
    %9 = arith.muli %7, %8 : vector<1x2x128xi32>
    %10 = arith.addi %9, %4 : vector<1x2x128xi32>
    %c0 = arith.constant 0 : index
    %11 = memref.load %arg2[%c0] : memref<1xi32, #tpu.memory_space<smem>>
    %c-1640531527_i32 = arith.constant -1640531527 : i32
    %12 = arith.addi %11, %c-1640531527_i32 : i32
    %c16_i32 = arith.constant 16 : i32
    %13 = arith.shrui %12, %c16_i32 : i32
    %14 = arith.xori %12, %13 : i32
    %c-2048144789_i32 = arith.constant -2048144789 : i32
    %15 = arith.muli %14, %c-2048144789_i32 : i32
    %c13_i32 = arith.constant 13 : i32
    %16 = arith.shrui %15, %c13_i32 : i32
    %17 = arith.xori %15, %16 : i32
    %c-1028477387_i32 = arith.constant -1028477387 : i32
    %18 = arith.muli %17, %c-1028477387_i32 : i32
    %c16_i32_1 = arith.constant 16 : i32
    %19 = arith.shrui %18, %c16_i32_1 : i32
    %20 = arith.xori %18, %19 : i32
    %21 = vector.broadcast %20 : i32 to vector<1x2x128xi32>
    %22 = arith.xori %10, %21 : vector<1x2x128xi32>
    %c16_i32_2 = arith.constant 16 : i32
    %23 = vector.broadcast %c16_i32_2 : i32 to vector<1x2x128xi32>
    %24 = arith.shrui %22, %23 : vector<1x2x128xi32>
    %25 = arith.xori %22, %24 : vector<1x2x128xi32>
    %c-2048144789_i32_3 = arith.constant -2048144789 : i32
    %26 = vector.broadcast %c-2048144789_i32_3 : i32 to vector<1x2x128xi32>
    %27 = arith.muli %25, %26 : vector<1x2x128xi32>
    %c13_i32_4 = arith.constant 13 : i32
    %28 = vector.broadcast %c13_i32_4 : i32 to vector<1x2x128xi32>
    %29 = arith.shrui %27, %28 : vector<1x2x128xi32>
    %30 = arith.xori %27, %29 : vector<1x2x128xi32>
    %c-1028477387_i32_5 = arith.constant -1028477387 : i32
    %31 = vector.broadcast %c-1028477387_i32_5 : i32 to vector<1x2x128xi32>
    %32 = arith.muli %30, %31 : vector<1x2x128xi32>
    %c16_i32_6 = arith.constant 16 : i32
    %33 = vector.broadcast %c16_i32_6 : i32 to vector<1x2x128xi32>
    %34 = arith.shrui %32, %33 : vector<1x2x128xi32>
    %35 = arith.xori %32, %34 : vector<1x2x128xi32>
    %c0_7 = arith.constant 0 : index
    %c0_8 = arith.constant 0 : index
    %c0_9 = arith.constant 0 : index
    %36 = vector.load %arg3[%c0_7, %c0_8, %c0_9] : memref<1x2x128xf32, #tpu.memory_space<vmem>>, vector<1x2x128xf32>
    %c0_10 = arith.constant 0 : index
    %c0_11 = arith.constant 0 : index
    %c0_12 = arith.constant 0 : index
    %37 = vector.load %arg4[%c0_10, %c0_11, %c0_12] : memref<1x2x128xf32, #tpu.memory_space<vmem>>, vector<1x2x128xf32>
    %38 = arith.addf %36, %37 : vector<1x2x128xf32>
    %c429496730_i32 = arith.constant 429496730 : i32
    %39 = vector.broadcast %c429496730_i32 : i32 to vector<1x2x128xi32>
    %40 = arith.cmpi uge, %35, %39 : vector<1x2x128xi32>
    %cst = arith.constant 1.11111116 : f32
    %41 = vector.broadcast %cst : f32 to vector<1x2x128xf32>
    %42 = arith.mulf %38, %41 : vector<1x2x128xf32>
    %cst_13 = arith.constant 0.000000e+00 : f32
    %43 = vector.broadcast %cst_13 : f32 to vector<1x2x128xf32>
    %44 = arith.select %40, %42, %43 : vector<1x2x128xi1>, vector<1x2x128xf32>
    %c0_14 = arith.constant 0 : index
    %c0_15 = arith.constant 0 : index
    %c0_16 = arith.constant 0 : index
    %45 = vector.load %arg5[%c0_14, %c0_15, %c0_16] : memref<1x2x128xf32, #tpu.memory_space<vmem>>, vector<1x2x128xf32>
    tpu.vector_store %arg5[%c0_14, %c0_15, %c0_16], %44 {strides = array<i32>} : memref<1x2x128xf32, #tpu.memory_space<vmem>>, vector<1x2x128xf32>,
    return
  }
  func.func @transform_0(%arg0: i32, %arg1: i32, %arg2: memref<1xi32, #tpu.memory_space<smem>>) -> (i32, i32, i32) {
    %c0_i32 = arith.constant 0 : i32
    %c0_i32_0 = arith.constant 0 : i32
    return %arg1, %arg0, %c0_i32 : i32, i32, i32
  }
  func.func @transform_1(%arg0: i32, %arg1: i32, %arg2: memref<1xi32, #tpu.memory_space<smem>>) -> (i32, i32, i32) {
    %c0_i32 = arith.constant 0 : i32
    %c0_i32_0 = arith.constant 0 : i32
    %c0_i32_1 = arith.constant 0 : i32
    return %c0_i32, %arg0, %c0_i32_0 : i32, i32, i32
  }
  func.func @transform_2(%arg0: i32, %arg1: i32, %arg2: memref<1xi32, #tpu.memory_space<smem>>) -> (i32, i32, i32) {
    %c0_i32 = arith.constant 0 : i32
    %c0_i32_0 = arith.constant 0 : i32
    return %arg1, %arg0, %c0_i32 : i32, i32, i32
  }
}

</mosaic_0001>

<llo_original>
// kernel: tpu_custom_call.1
$region0: #{tpu_custom_call.1}
  #allocation0 [shape = 'u32[]', space=smem, size = 0x4, offset = 0x4, fixed_abs, tag = 'smem constant byte address 0x4 - core index']
  #allocation1 [shape = 'u32[144,128]{1,0:T(1,128)}', space=vmem, size = 0x12000, scoped, tag = 'internal scratch']
  #allocation2 [shape = 's32[1]{0}', space=sflag, size = 0x4, scoped, tag = 'scoped memory for tpu_custom_call.1']
  #allocation3 [shape = 's32[1]{0:T(128)S(6)}', space=smem, size = 0x200, scoped, tag = 'prefetched SMEM operand 0']
  %s0 = inlined_call_operand.<no memory space> [shape: s32[1], index: 0, kind: input, shape index: {}]
  %s1 = inlined_call_operand.hbm [shape: f32[2,2,128], index: 1, kind: input, shape index: {}]
  %s2 = inlined_call_operand.vmem [shape: f32[1,2,128], index: 2, kind: input, shape index: {}]
  %s3 = inlined_call_operand.hbm [shape: f32[2,2,128], index: 3, kind: output, shape index: {}]
  %s4 = sld [smem:[#allocation0]]
  $region45: #{tpu_custom_call.1} parent=0
    _
  %s6 = ssub.s32 1, %s4
  %s7 = scalar_select 0, %s6, %s4
  %8 = sst [smem:[#allocation3]] %s0
  $region1: #{tpu_custom_call.1} parent=0
    #allocation4 [shape = 'u8[2048]{0}', space=vmem, size = 0x800, scoped, tag = 'input window, operand 1']
    #allocation5 [shape = 's32[2]{0}', space=sflag, size = 0x8, scoped, tag = 'scoped memory for tpu_custom_call.1']
    #allocation6 [shape = 's32[2]{0}', space=sflag, size = 0x8, scoped, tag = 'scoped memory for tpu_custom_call.1']
    #allocation7 [shape = 'u8[2048]{0}', space=vmem, size = 0x800, scoped, tag = 'output window, operand 0']
    %9 = vsyncpa [#allocation5], 0
    %s10 = scalar_lea.sflag [#allocation5], 1
    %11 = vsyncpa %s10, 0
    %12 = vsyncpa [#allocation6], 0
    %s13 = scalar_lea.sflag [#allocation6], 1
    %14 = vsyncpa %s13, 0
    loop: start=0, step=1, limit=4
    $region2: #{tpu_custom_call.1} parent=1 // loop_pre_header
      _
    $region3: #{tpu_custom_call.1} parent=1 // loop_header
      %s16 = sphi 0, %s20
      %p17 = scmp.ge.s32.totalorder %s16, 4
      %s23 = sphi 0, %s35
      %s24 = sphi 0, %s31
      %s25 = sphi 0, %s23
      %s26 = sphi 0, %s24
      %s27 = sphi 0, %s25
      %s28 = sphi 0, %s26
      %s40 = sphi 0, %s42
      %s43 = sphi 0, %s40
      %s44 = sphi 0, %s43
      %s60 = sphi 0, %s44
      %s66 = sphi 0, %s68
      %s69 = sphi 0, %s66
      %s70 = sphi 0, %s69
      %s86 = sphi 0, %s70
      %s94 = sphi 0, %s96
      %s97 = sphi 0, %s94
      %s98 = sphi 0, %s97
      %s114 = sphi 0, %s98
    $region4: #{tpu_custom_call.1} parent=1 // loop_header_branch
      %19 = sbr.rel (%p17) target = $region8
    $region5: #{tpu_custom_call.1} parent=1 // loop_body
      %s21 = ssub.s32 %s16, 1
      %s22 = ssub.s32 %s16, 2
      %s29 = sadd.s32 1, %s24
      %p30 = scmp.ge.s32.totalorder %s29, 2
      %s31 = scalar_select %p30, 0, %s29
      %s32 = sadd.s32 1, %s23
      %s33 = scalar_select %p30, %s32, %s23
      %p34 = scmp.ge.s32.totalorder %s33, 1
      %s35 = scalar_select %p34, 0, %s33
      %s36 = ssub.s32 %s24, %s31
      %s37 = ssub.s32 %s23, %s35
      %s38 = sor.u32 %s36, %s37
      %p39 = scmp.eq.s32.totalorder %s38, 0
      %s41 = sadd.s32 %s40, 1
      %s42 = scalar_select %p39, %s40, %s41
      %p45 = pneg %p39
      %p46 = scmp.eq.s32.totalorder %s16, 1
      %p47 = por %p45, %p46
      %p48 = scmp.ne.s32.totalorder %s40, %s43
      %p49 = scmp.eq.s32.totalorder %s16, 0
      %p50 = por %p48, %p49
      %p51 = scmp.ne.s32.totalorder %s40, %s43
      %p52 = scmp.eq.s32.totalorder %s21, 1
      %p53 = por %p51, %p52
      %p54 = scmp.ne.s32.totalorder %s43, %s44
      %p55 = scmp.eq.s32.totalorder %s21, 0
      %p56 = por %p54, %p55
      %p57 = scmp.ne.s32.totalorder %s43, %s44
      %p58 = scmp.eq.s32.totalorder %s22, 1
      %p59 = por %p57, %p58
      %p61 = scmp.ne.s32.totalorder %s44, %s60
      %p62 = scmp.eq.s32.totalorder %s22, 0
      %p63 = por %p61, %p62
      %s64 = ssub.s32 %s23, %s35
      %p65 = scmp.eq.s32.totalorder %s64, 0
      %s67 = sadd.s32 %s66, 1
      %s68 = scalar_select %p65, %s66, %s67
      %p71 = pneg %p65
      %p72 = scmp.eq.s32.totalorder %s16, 1
      %p73 = por %p71, %p72
      %p74 = scmp.ne.s32.totalorder %s66, %s69
      %p75 = scmp.eq.s32.totalorder %s16, 0
      %p76 = por %p74, %p75
      %p77 = scmp.ne.s32.totalorder %s66, %s69
      %p78 = scmp.eq.s32.totalorder %s21, 1
      %p79 = por %p77, %p78
      %p80 = scmp.ne.s32.totalorder %s69, %s70
      %p81 = scmp.eq.s32.totalorder %s21, 0
      %p82 = por %p80, %p81
      %p83 = scmp.ne.s32.totalorder %s69, %s70
      %p84 = scmp.eq.s32.totalorder %s22, 1
      %p85 = por %p83, %p84
      %p87 = scmp.ne.s32.totalorder %s70, %s86
      %p88 = scmp.eq.s32.totalorder %s22, 0
      %p89 = por %p87, %p88
      %s90 = ssub.s32 %s24, %s31
      %s91 = ssub.s32 %s23, %s35
      %s92 = sor.u32 %s90, %s91
      %p93 = scmp.eq.s32.totalorder %s92, 0
      %s95 = sadd.s32 %s94, 1
      %s96 = scalar_select %p93, %s94, %s95
      %p99 = pneg %p93
      %p100 = scmp.eq.s32.totalorder %s16, 1
      %p101 = por %p99, %p100
      %p102 = scmp.ne.s32.totalorder %s94, %s97
      %p103 = scmp.eq.s32.totalorder %s16, 0
      %p104 = por %p102, %p103
      %p105 = scmp.ne.s32.totalorder %s94, %s97
      %p106 = scmp.eq.s32.totalorder %s21, 1
      %p107 = por %p105, %p106
      %p108 = scmp.ne.s32.totalorder %s97, %s98
      %p109 = scmp.eq.s32.totalorder %s21, 0
      %p110 = por %p108, %p109
      %p111 = scmp.ne.s32.totalorder %s97, %s98
      %p112 = scmp.eq.s32.totalorder %s22, 1
      %p113 = por %p111, %p112
      %p115 = scmp.ne.s32.totalorder %s98, %s114
      %p116 = scmp.eq.s32.totalorder %s22, 0
      %p117 = por %p115, %p116
      %p118 = scmp.le.s32.totalorder 1, %s16
      %p119 = scmp.lt.s32.totalorder %s16, 3
      %p120 = pnand %p118, %p119
      %p121 = pneg %p120
      // Predicated region
      $region9: #{tpu_custom_call.1} parent=5 // pred_check
        _
      $region10: #{tpu_custom_call.1} parent=5 // pred_check_branch
        %123 = sbr.rel (%p120) target = $region12
      $region11: #{tpu_custom_call.1} parent=5 // pred_region
        %s124 = ssub.s32 %s16, 1
        // Predicated region
        $region13: #{tpu_custom_call.1} parent=11 // pred_check
          %p125 = pneg %p82
        $region14: #{tpu_custom_call.1} parent=11 // pred_check_branch
          %127 = sbr.rel (%p125) target = $region16
        $region15: #{tpu_custom_call.1} parent=11 // pred_region
          %p128 = scmp.lt.s32.totalorder %s25, 0
          %s129 = scalar_select %p128, %s25, 0
          %s130 = smul.addr %s129, 2
          %s131 = scalar_lea.vmem %s2, %s130
        $region16: #{tpu_custom_call.1} parent=11 // pred_fallthru
          _
      $region12: #{tpu_custom_call.1} parent=5 // pred_fallthru
        _
      %p132 = scmp.lt.s32.totalorder %s16, 2
      // Predicated region
      $region17: #{tpu_custom_call.1} parent=5 // pred_check
        %p133 = pneg %p132
      $region18: #{tpu_custom_call.1} parent=5 // pred_check_branch
        %135 = sbr.rel (%p133) target = $region20
      $region19: #{tpu_custom_call.1} parent=5 // pred_region
        // Predicated region
        $region21: #{tpu_custom_call.1} parent=19 // pred_check
          %p136 = pneg %p50
        $region22: #{tpu_custom_call.1} parent=19 // pred_check_branch
          %138 = sbr.rel (%p136) target = $region24
        $region23: #{tpu_custom_call.1} parent=19 // pred_region
          %s139 = sand.u32 %s40, 1
          %s140 = scalar_lea.sflag [#allocation5], %s139
          %s141 = sand.u32 %s40, 1
          %s142 = smul.addr %s141, 2
          %s143 = scalar_lea.vmem [#allocation4], %s142
          %s145 = ssub.s32 32, 32
          %146 = vsyncadd %s140, %s145
          %s147 = sadd.s32 %s23, %s24
          %s148 = smul.addr %s147, 32
          %s149 = scalar_lea.hbm %s1, %s148
          %s151 = sshll.u32 %s143, 4
          %s152 = int_to_ptr.vmem [resolvable:$true] %s151
          %154 = dma.hbm_to_vmem [thread:$0]  %s149, 32, %s152, %s140
        $region24: #{tpu_custom_call.1} parent=19 // pred_fallthru
          _
      $region20: #{tpu_custom_call.1} parent=5 // pred_fallthru
        _
      %p155 = scmp.le.s32.totalorder 1, %s16
      %p156 = scmp.lt.s32.totalorder %s16, 3
      %p157 = pnand %p155, %p156
      %p158 = pneg %p157
      // Predicated region
      $region25: #{tpu_custom_call.1} parent=5 // pred_check
        _
      $region26: #{tpu_custom_call.1} parent=5 // pred_check_branch
        %160 = sbr.rel (%p157) target = $region28
      $region27: #{tpu_custom_call.1} parent=5 // pred_region
        %s161 = ssub.s32 %s16, 1
        %s162 = sand.u32 %s43, 1
        %s163 = scalar_lea.sflag [#allocation5], %s162
        %s164 = sand.u32 %s43, 1
        %s165 = smul.addr %s164, 2
        %s166 = scalar_lea.vmem [#allocation4], %s165
        // Predicated region
        $region29: #{tpu_custom_call.1} parent=27 // pred_check
          %p167 = pneg %p56
        $region30: #{tpu_custom_call.1} parent=27 // pred_check_branch
          %169 = sbr.rel (%p167) target = $region32
        $region31: #{tpu_custom_call.1} parent=27 // pred_region
          %170 = dma.done %s163, 32
        $region32: #{tpu_custom_call.1} parent=27 // pred_fallthru
          _
        %s171 = sand.u32 %s43, 1
        %s172 = scalar_lea.sflag [#allocation5], %s171
        %s173 = sand.u32 %s43, 1
        %s174 = smul.addr %s173, 2
        %s175 = scalar_lea.vmem [#allocation4], %s174
        %p176 = pneg %p56
        %p177 = pneg %p53
        %p178 = scmp.lt.s32.totalorder %s25, 0
        %s179 = scalar_select %p178, %s25, 0
        %s180 = smul.addr %s179, 2
        %s181 = scalar_lea.vmem %s2, %s180
        %p182 = pneg %p82
        %p183 = pneg %p79
        %p184 = pneg %p110
        %p185 = pneg %p107
        %s186 = sand.u32 %s97, 1
        %s187 = scalar_lea.sflag [#allocation6], %s186
        %s188 = sand.u32 %s97, 1
        %s189 = smul.addr %s188, 2
        %s190 = scalar_lea.vmem [#allocation7], %s189
        %p191 = scmp.lt.s32.totalorder %s25, 0
        %s192 = scalar_select %p191, %s25, 0
        %s193 = smul.addr %s192, 2
        %s194 = scalar_lea.vmem %s2, %s193
        %s195 = smul.u32 %s25, 2
        %v196 = vlaneseq
        %v197 = vshrl.u32 %v196, 7
        %v198 = vstv %s195
        %v199 = vadd.s32 %v197, %v198
        %v200 = vlaneseq
        %v201 = vand.u32 %v200, 127
        %s202 = smul.u32 %s26, 2
        %v203 = vstv %s202
        %v204 = vadd.s32 %v203, %v199
        %v205 = vmul.u32 %v204, 128
        %v206 = vadd.s32 %v205, %v201
        %s207 = sld [smem:[#allocation3]]
        %s208 = sadd.s32 %s207, 2654435769
        %s209 = sshrl.u32 %s208, 16
        %s210 = sxor.u32 %s208, %s209
        %s211 = smul.u32 %s210, 2246822507
        %s212 = sshrl.u32 %s211, 13
        %s213 = sxor.u32 %s211, %s212
        %s214 = smul.u32 %s213, 3266489909
        %s215 = sshrl.u32 %s214, 16
        %s216 = sxor.u32 %s214, %s215
        %v217 = vstv %s216
        %v218 = vxor.u32 %v206, %v217
        %v219 = vshrl.u32 %v218, 16
        %v220 = vxor.u32 %v218, %v219
        %v221 = vmul.u32 %v220, 2246822507
        %v222 = vshrl.u32 %v221, 13
        %v223 = vxor.u32 %v221, %v222
        %v224 = vmul.u32 %v223, 3266489909
        %v225 = vshrl.u32 %v224, 16
        %v226 = vxor.u32 %v224, %v225
        %v227 = vld [vmem:[%s166] sm:$0x3]
        %v228 = vld [vmem:[%s194] sm:$0x3]
        %v229 = vadd.f32 %v227, %v228
        %vm230 = vcmp.ge.u32.totalorder %v226, 429496730
        %v231 = vmul.f32 %v229, 1.1111112
        %v232 = vsel %vm230, %v231, 0.0
        %233 = vst [vmem:[%s190] sm:$0x3] %v232
        %s234 = sand.u32 %s97, 1
        %s235 = scalar_lea.sflag [#allocation6], %s234
        %s236 = sand.u32 %s97, 1
        %s237 = smul.addr %s236, 2
        %s238 = scalar_lea.vmem [#allocation7], %s237
        // Predicated region
        $region33: #{tpu_custom_call.1} parent=27 // pred_check
          %p239 = pneg %p107
        $region34: #{tpu_custom_call.1} parent=27 // pred_check_branch
          %241 = sbr.rel (%p239) target = $region36
        $region35: #{tpu_custom_call.1} parent=27 // pred_region
          %s243 = ssub.s32 32, 32
          %244 = vsyncadd %s235, %s243
          %s245 = sadd.s32 %s25, %s26
          %s246 = smul.addr %s245, 32
          %s247 = scalar_lea.hbm %s3, %s246
          %s249 = sshll.u32 %s238, 4
          %s250 = int_to_ptr.vmem [resolvable:$true] %s249
          %252 = dma.vmem_to_hbm [thread:$0]  %s250, 32, %s247, %s235
        $region36: #{tpu_custom_call.1} parent=27 // pred_fallthru
          _
      $region28: #{tpu_custom_call.1} parent=5 // pred_fallthru
        _
      %p253 = scmp.le.s32.totalorder 2, %s16
      // Predicated region
      $region37: #{tpu_custom_call.1} parent=5 // pred_check
        %p254 = pneg %p253
      $region38: #{tpu_custom_call.1} parent=5 // pred_check_branch
        %256 = sbr.rel (%p254) target = $region40
      $region39: #{tpu_custom_call.1} parent=5 // pred_region
        %s257 = ssub.s32 %s16, 2
        // Predicated region
        $region41: #{tpu_custom_call.1} parent=39 // pred_check
          %p258 = pneg %p113
        $region42: #{tpu_custom_call.1} parent=39 // pred_check_branch
          %260 = sbr.rel (%p258) target = $region44
        $region43: #{tpu_custom_call.1} parent=39 // pred_region
          %s261 = sand.u32 %s98, 1
          %s262 = scalar_lea.sflag [#allocation6], %s261
          %s263 = sand.u32 %s98, 1
          %s264 = smul.addr %s263, 2
          %s265 = scalar_lea.vmem [#allocation7], %s264
          %266 = dma.done %s262, 32
        $region44: #{tpu_custom_call.1} parent=39 // pred_fallthru
          _
      $region40: #{tpu_custom_call.1} parent=5 // pred_fallthru
        _
    $region6: #{tpu_custom_call.1} parent=1 // loop_footer
      %s20 = sadd.s32 1, %s16
    $region7: #{tpu_custom_call.1} parent=1 // loop_footer_branch
      %15 = sbr.rel target = $region3
    $region8: #{tpu_custom_call.1} parent=1 // loop_exit
      _
    %267 = vsyncpa [#allocation5], 1
    %s268 = scalar_lea.sflag [#allocation5], 1
    %269 = vsyncpa %s268, 1
    %270 = vsyncpa [#allocation6], 1
    %s271 = scalar_lea.sflag [#allocation6], 1
    %272 = vsyncpa %s271, 1

</llo_original>
